<compile_context>
chip_gen: v5e
topology: v5e:2x2
jax: 0.10.0
libtpu: 0.0.40
codegen_flags: <defaults>
</compile_context>

<pallas_src>
import math

import jax
import jax.numpy as jnp
import numpy as np
from jax import lax
from jax.experimental import pallas as pl
from jax.experimental.pallas import tpu as pltpu


# ----------------------------------------------------------------------------
# Fused per-layer Pallas kernel:
#   LongConv (causal, channel-mixing) + bias + GELU
#   + Downsample(k=3, s=2, p=1) [+ final 1x1 conv folded into the last layer].
# ----------------------------------------------------------------------------
def fused_layer_kernel(x_ref, a_ref, d_ref, blc_ref, bds_ref, o_ref, acc_ref):
    """One batch row x one contraction chunk.

    x_ref:   (1, 1, 1, tk)  bf16  chunk of the flattened (Cin*L) input row
    a_ref:   (1, tk, N)     bf16  chunk of the folded causal-conv operator
    d_ref:   (N, P)         bf16  folded downsample (+ final 1x1) operator
    blc_ref: (1, N)         f32   long-conv bias, broadcast over time
    bds_ref: (1, P)         f32   downsample bias, broadcast over time
    o_ref:   (1, 1, P)            layer output row (lane-dense, P % 128 == 0)
    acc_ref: (1, N)         f32   VMEM accumulator scratch
    """
    k = pl.program_id(1)

    @pl.when(k == 0)
    def _init():
        acc_ref[...] = jnp.zeros_like(acc_ref)

    # Long conv: lags folded into the contraction dim -> one MXU matmul per
    # contraction chunk, accumulated in f32 VMEM scratch.
    acc_ref[...] += jnp.dot(x_ref[0, 0], a_ref[0],
                            preferred_element_type=jnp.float32)

    @pl.when(k == pl.num_programs(1) - 1)
    def _finalize():
        # GELU stays in f32.
        g = jax.nn.gelu(acc_ref[...] + blc_ref[...], approximate=True)
        # Fused stride-2 downsample (+ folded final 1x1 for the last layer).
        z = jnp.dot(g.astype(d_ref.dtype), d_ref[...],
                    preferred_element_type=jnp.float32) + bds_ref[...]
        o_ref[0] = z.astype(o_ref.dtype)


# Contraction-chunk cap.  Kept small here so the reduction grid axis is
# exercised even at toy sizes; at real seq_len this would be sized from the
# VMEM budget (e.g. ~2048).
_K_CHUNK_MAX = 64


def _pick_k_chunk(K, cap=_K_CHUNK_MAX):
    if K <= cap:
        return K
    for d in range(cap - cap % 8, 7, -8):   # largest multiple-of-8 divisor
        if K % d == 0:
            return d
    return K


def fused_layer_apply(h, A, D, blc, bds, out_dtype):
    """h: (B, K) flattened activation; returns (B, P) flattened activation."""
    B, K = h.shape
    N = A.shape[1]
    P = D.shape[1]
    tk = _pick_k_chunk(K)
    nk = K // tk

    # Expose the contraction chunks as full trailing block dims (clean (8,128)
    # tiling: every block's last two dims equal the full array dims).
    x4 = h.astype(jnp.bfloat16).reshape(B, nk, 1, tk)
    a3 = A.reshape(nk, tk, N)

    out = pl.pallas_call(
        fused_layer_kernel,
        out_shape=jax.ShapeDtypeStruct((B, 1, P), out_dtype),
        grid=(B, nk),
        in_specs=[
            pl.BlockSpec((1, 1, 1, tk), lambda b, k: (b, k, 0, 0)),
            pl.BlockSpec((1, tk, N), lambda b, k: (k, 0, 0)),
            pl.BlockSpec((N, P), lambda b, k: (0, 0)),
            pl.BlockSpec((1, N), lambda b, k: (0, 0)),
            pl.BlockSpec((1, P), lambda b, k: (0, 0)),
        ],
        out_specs=pl.BlockSpec((1, 1, P), lambda b, k: (b, 0, 0)),
        scratch_shapes=[pltpu.VMEM((1, N), jnp.float32)],
        compiler_params=pltpu.CompilerParams(
            dimension_semantics=("parallel", "arbitrary"),
            vmem_limit_bytes=48 * 1024 * 1024,   # under every gen's physical VMEM
        ),
    )(x4, a3, D, blc, bds)
    return out.reshape(B, P)


# ----------------------------------------------------------------------------
# Deterministic parameter construction (synthetic init, no checkpoint)
# ----------------------------------------------------------------------------
def num_scales(seq_len, kernel_dim, interp_factor):
    n, total, length = 0, 0, kernel_dim
    while total < seq_len:
        total += length
        length *= interp_factor
        n += 1
    return n


def init_longconv(key, cin, cout, chan_, kernel_dim, L, interp_factor, decay_coef):
    kk, kd, kw, kb = jax.random.split(key, 4)
    ns = num_scales(L, kernel_dim, interp_factor)
    heads = chan_ * cin
    k_sub = 0.2 * jax.random.normal(kk, (heads, ns, kernel_dim), jnp.float32)
    skip_d = jax.random.normal(kd, (heads,), jnp.float32)
    w_proj = jax.random.normal(kw, (cout, heads), jnp.float32) / math.sqrt(heads)
    b_proj = 0.01 * jax.random.normal(kb, (cout,), jnp.float32)

    # Materialize the multi-scale long kernel (parameter-only).
    segs = []
    for i in range(ns):
        segs.append(jnp.repeat(k_sub[:, i, :], interp_factor ** i, axis=-1)
                    * (decay_coef ** i))
    kfull = jnp.concatenate(segs, axis=-1)[:, :L]              # (heads, L)

    # Fold depthwise conv + skip + output projection into one dense causal conv
    # weight M[o, c, s] (identical math by linearity).
    kf = kfull.reshape(chan_, cin, L)
    wp3 = w_proj.reshape(cout, chan_, cin)
    M = jnp.einsum("oqc,qcs->ocs", wp3, kf)                    # (Cout, Cin, L)
    M = M.at[:, :, 0].add(jnp.einsum("oqc,qc->oc", wp3, skip_d.reshape(chan_, cin)))
    return M, b_proj


def init_conv(key, cin, cout, ksize):
    kw, kb = jax.random.split(key)
    bound = 1.0 / math.sqrt(cin * ksize)
    W = jax.random.uniform(kw, (cout, cin, ksize), jnp.float32, -bound, bound)
    b = jax.random.uniform(kb, (cout,), jnp.float32, -bound, bound)
    return W, b


def build_encoder_params(key, in_channels, channels_list, latent_channels,
                         kernel_dim, seq_len, chan_, interp_factor, decay_coef):
    raw = []
    cin, L = in_channels, seq_len
    for i, cout in enumerate(channels_list):
        klc, kds = jax.random.split(jax.random.fold_in(key, i))
        M, b_lc = init_longconv(klc, cin, cout, chan_, kernel_dim, L,
                                interp_factor, decay_coef)
        Wd, b_ds = init_conv(kds, cout, cout, 3)
        raw.append((M, b_lc, Wd, b_ds, L))
        L //= 2
        cin = cout
    W1, b1 = init_conv(jax.random.fold_in(key, 10_000),
                       channels_list[-1], latent_channels, 1)
    return raw, (W1, b1)


# ----------------------------------------------------------------------------
# Parameter-only folding into lane-dense operators (input independent)
# ----------------------------------------------------------------------------
def fold_longconv_operator(M, b_lc, L):
    """A[c*L+u, o*L+t] = M[o, c, t-u] for t>=u else 0 (causal Toeplitz)."""
    cout, cin, _ = M.shape
    u = jnp.arange(L)[:, None]
    t = jnp.arange(L)[None, :]
    s = t - u
    Mg = M[:, :, jnp.clip(s, 0, L - 1)]                        # (Cout, Cin, L, L)
    A4 = jnp.where((s >= 0)[None, None], Mg, 0.0)
    A = jnp.transpose(A4, (1, 2, 0, 3)).reshape(cin * L, cout * L)
    blc = jnp.repeat(b_lc, L)[None, :]                         # (1, Cout*L)
    return A, blc


def fold_downsample_operator(Wd, b_ds, L):
    """D[o*L+t, p*(L/2)+t'] = Wd[p, o, k] where t = 2t'+k-1 (k in 0..2)."""
    cds, cin, _ = Wd.shape
    Lh = L // 2
    t = jnp.arange(L)[:, None]
    tp = jnp.arange(Lh)[None, :]
    k = t - 2 * tp + 1
    valid = (k >= 0) & (k <= 2)
    Wg = Wd[:, :, jnp.clip(k, 0, 2)]                           # (Cds, Cin, L, Lh)
    D4 = jnp.where(valid[None, None], Wg, 0.0)
    D = jnp.transpose(D4, (1, 2, 0, 3)).reshape(cin * L, cds * Lh)
    bds = jnp.repeat(b_ds, Lh)[None, :]                        # (1, Cds*Lh)
    return D, bds


def fold_encoder_params(raw, out_raw):
    W1, b1 = out_raw
    W1_2d = W1[:, :, 0]
    folded = []
    for i, (M, b_lc, Wd, b_ds, L) in enumerate(raw):
        A, blc = fold_longconv_operator(M, b_lc, L)
        if i == len(raw) - 1:
            # Fold the final 1x1 conv into the last downsample (parameter-only).
            Wd = jnp.einsum("qp,pok->qok", W1_2d, Wd)
            b_ds = W1_2d @ b_ds + b1
        D, bds = fold_downsample_operator(Wd, b_ds, L)
        folded.append((A.astype(jnp.bfloat16), blc.astype(jnp.float32),
                       D.astype(jnp.bfloat16), bds.astype(jnp.float32)))
    return folded


# ----------------------------------------------------------------------------
# Encoder forward (Pallas) and pure-JAX reference
# ----------------------------------------------------------------------------
def encoder_forward(x, folded_params):
    B, cin, L = x.shape
    h = x.reshape(B, cin * L)                        # flattened (channel, time)
    n = len(folded_params)
    for i, (A, blc, D, bds) in enumerate(folded_params):
        out_dtype = jnp.float32 if i == n - 1 else jnp.bfloat16
        h = fused_layer_apply(h, A, D, blc, bds, out_dtype)
    return h                                         # (B, Clat * L_final)


def ref_forward(x, raw, out_raw):
    dn = ("NCH", "OIH", "NCH")
    for (M, b_lc, Wd, b_ds, L) in raw:
        y = lax.conv_general_dilated(x, jnp.flip(M, -1), (1,), [(L - 1, 0)],
                                     dimension_numbers=dn)
        x = jax.nn.gelu(y + b_lc[None, :, None], approximate=True)
        x = lax.conv_general_dilated(x, Wd, (2,), [(1, 1)],
                                     dimension_numbers=dn) + b_ds[None, :, None]
    W1, b1 = out_raw
    return lax.conv_general_dilated(x, W1, (1,), [(0, 0)],
                                    dimension_numbers=dn) + b1[None, :, None]


# ----------------------------------------------------------------------------
if __name__ == "__main__":
    # Small hyper-parameters consistent with the module structure.
    in_channels = 3
    channels_list = [8, 16]
    latent_channels = 16
    kernel_dim = 8
    seq_len = 32
    chan_ = 3
    interp_factor = 2
    decay_coef = 0.5
    batch = 2

    key = jax.random.PRNGKey(0)
    kx, kp = jax.random.split(key)
    x = jax.random.normal(kx, (batch, in_channels, seq_len), jnp.float32)

    raw, out_raw = build_encoder_params(
        kp, in_channels, channels_list, latent_channels,
        kernel_dim, seq_len, chan_, interp_factor, decay_coef)
    folded = fold_encoder_params(raw, out_raw)

    L_final = seq_len // (2 ** len(channels_list))
    out_flat = jax.block_until_ready(encoder_forward(x, folded))
    out = out_flat.reshape(batch, latent_channels, L_final)
    ref = jax.block_until_ready(ref_forward(x, raw, out_raw))

    assert out.shape == (batch, latent_channels, L_final)
    assert ref.shape == out.shape
    # bf16 weights/activations in the Pallas path -> loosened tolerance.
    np.testing.assert_allclose(np.asarray(out), np.asarray(ref),
                               rtol=4e-2, atol=4e-2)
    print("KERNEL_OK")
</pallas_src>

<mosaic_0001>
module attributes {stable_mosaic.version = 11 : i64} {
  func.func @fused_layer_kernel(%arg0: i32, %arg1: i32, %arg2: memref<1x1x1x48xbf16, #tpu.memory_space<vmem>>, %arg3: memref<1x48x256xbf16, #tpu.memory_space<vmem>>, %arg4: memref<256x128xbf16, #tpu.memory_space<vmem>>, %arg5: memref<1x256xf32, #tpu.memory_space<vmem>>, %arg6: memref<1x128xf32, #tpu.memory_space<vmem>>, %arg7: memref<1x1x128xbf16, #tpu.memory_space<vmem>>, %arg8: memref<1x256xf32, #tpu.memory_space<vmem>>) attributes {dimension_semantics = [#tpu.dimension_semantics<parallel>, #tpu.dimension_semantics<arbitrary>], iteration_bounds = array<i64: 2, 2>, scalar_prefetch = 0 : i64, scratch_operands = 1 : i64, tpu.core_type = #tpu.core_type<tc>, window_params = [{transform_indices = @transform_0, window_bounds = array<i64: 1, 1, 1, 48>}, {transform_indices = @transform_1, window_bounds = array<i64: 1, 48, 256>}, {pipeline_mode = #tpu.pipeline_mode<synchronous>, transform_indices = @transform_2, window_bounds = array<i64: 256, 128>}, {pipeline_mode = #tpu.pipeline_mode<synchronous>, transform_indices = @transform_3, window_bounds = array<i64: 1, 256>}, {pipeline_mode = #tpu.pipeline_mode<synchronous>, transform_indices = @transform_4, window_bounds = array<i64: 1, 128>}, {transform_indices = @transform_5, window_bounds = array<i64: 1, 1, 128>}]} {
    %c0_i32 = arith.constant 0 : i32
    %0 = arith.cmpi eq, %arg1, %c0_i32 : i32
    %1 = arith.extui %0 : i1 to i32
    %c0_i32_0 = arith.constant 0 : i32
    %2 = arith.cmpi ne, %1, %c0_i32_0 : i32
    scf.if %2 {
      %cst_12 = arith.constant 0.000000e+00 : f32
      %14 = vector.broadcast %cst_12 : f32 to vector<1x256xf32>
      %c0_13 = arith.constant 0 : index
      %c0_14 = arith.constant 0 : index
      %15 = vector.load %arg8[%c0_13, %c0_14] : memref<1x256xf32, #tpu.memory_space<vmem>>, vector<1x256xf32>
      tpu.vector_store %arg8[%c0_13, %c0_14], %14 {strides = array<i32>} : memref<1x256xf32, #tpu.memory_space<vmem>>, vector<1x256xf32>,
    } else {
    }
    %c0 = arith.constant 0 : index
    %c0_1 = arith.constant 0 : index
    %3 = vector.load %arg8[%c0, %c0_1] : memref<1x256xf32, #tpu.memory_space<vmem>>, vector<1x256xf32>
    %c0_2 = arith.constant 0 : index
    %c0_3 = arith.constant 0 : index
    %c0_4 = arith.constant 0 : index
    %c0_5 = arith.constant 0 : index
    %4 = vector.load %arg2[%c0_2, %c0_3, %c0_4, %c0_5] : memref<1x1x1x48xbf16, #tpu.memory_space<vmem>>, vector<1x1x1x48xbf16>
    %5 = vector.shape_cast %4 : vector<1x1x1x48xbf16> to vector<1x48xbf16>
    %c0_6 = arith.constant 0 : index
    %c0_7 = arith.constant 0 : index
    %c0_8 = arith.constant 0 : index
    %6 = vector.load %arg3[%c0_6, %c0_7, %c0_8] : memref<1x48x256xbf16, #tpu.memory_space<vmem>>, vector<1x48x256xbf16>
    %7 = vector.shape_cast %6 : vector<1x48x256xbf16> to vector<48x256xbf16>
    %cst = arith.constant dense<0.000000e+00> : vector<1x256xf32>
    %8 = tpu.matmul %5, %7, %cst {dimension_numbers = #tpu.dot_dimension_numbers<[1], [0], [0], [1], [0, 0, 1, 1], [], []>} : vector<1x48xbf16>, vector<48x256xbf16>, vector<1x256xf32> -> vector<1x256xf32>
    %9 = arith.addf %3, %8 : vector<1x256xf32>
    %c0_9 = arith.constant 0 : index
    %c0_10 = arith.constant 0 : index
    %10 = vector.load %arg8[%c0_9, %c0_10] : memref<1x256xf32, #tpu.memory_space<vmem>>, vector<1x256xf32>
    tpu.vector_store %arg8[%c0_9, %c0_10], %9 {strides = array<i32>} : memref<1x256xf32, #tpu.memory_space<vmem>>, vector<1x256xf32>,
    %c1_i32 = arith.constant 1 : i32
    %11 = arith.cmpi eq, %arg1, %c1_i32 : i32
    %12 = arith.extui %11 : i1 to i32
    %c0_i32_11 = arith.constant 0 : i32
    %13 = arith.cmpi ne, %12, %c0_i32_11 : i32
    scf.if %13 {
      %c0_12 = arith.constant 0 : index
      %c0_13 = arith.constant 0 : index
      %14 = vector.load %arg8[%c0_12, %c0_13] : memref<1x256xf32, #tpu.memory_space<vmem>>, vector<1x256xf32>
      %c0_14 = arith.constant 0 : index
      %c0_15 = arith.constant 0 : index
      %15 = vector.load %arg5[%c0_14, %c0_15] : memref<1x256xf32, #tpu.memory_space<vmem>>, vector<1x256xf32>
      %16 = arith.addf %14, %15 : vector<1x256xf32>
      %17 = arith.mulf %16, %16 : vector<1x256xf32>
      %18 = arith.mulf %16, %17 : vector<1x256xf32>
      %cst_16 = arith.constant 4.471500e-02 : f32
      %19 = vector.broadcast %cst_16 : f32 to vector<1x256xf32>
      %20 = arith.mulf %19, %18 : vector<1x256xf32>
      %21 = arith.addf %16, %20 : vector<1x256xf32>
      %cst_17 = arith.constant 0.797884583 : f32
      %22 = vector.broadcast %cst_17 : f32 to vector<1x256xf32>
      %23 = arith.mulf %22, %21 : vector<1x256xf32>
      %24 = math.tanh %23 : vector<1x256xf32>
      %cst_18 = arith.constant 1.000000e+00 : f32
      %25 = vector.broadcast %cst_18 : f32 to vector<1x256xf32>
      %26 = arith.addf %25, %24 : vector<1x256xf32>
      %cst_19 = arith.constant 5.000000e-01 : f32
      %27 = vector.broadcast %cst_19 : f32 to vector<1x256xf32>
      %28 = arith.mulf %27, %26 : vector<1x256xf32>
      %29 = arith.mulf %16, %28 : vector<1x256xf32>
      %30 = arith.truncf %29 : vector<1x256xf32> to vector<1x256xbf16>
      %c0_20 = arith.constant 0 : index
      %c0_21 = arith.constant 0 : index
      %31 = vector.load %arg4[%c0_20, %c0_21] : memref<256x128xbf16, #tpu.memory_space<vmem>>, vector<256x128xbf16>
      %cst_22 = arith.constant dense<0.000000e+00> : vector<1x128xf32>
      %32 = tpu.matmul %30, %31, %cst_22 {dimension_numbers = #tpu.dot_dimension_numbers<[1], [0], [0], [1], [0, 0, 1, 1], [], []>} : vector<1x256xbf16>, vector<256x128xbf16>, vector<1x128xf32> -> vector<1x128xf32>
      %c0_23 = arith.constant 0 : index
      %c0_24 = arith.constant 0 : index
      %33 = vector.load %arg6[%c0_23, %c0_24] : memref<1x128xf32, #tpu.memory_space<vmem>>, vector<1x128xf32>
      %34 = arith.addf %32, %33 : vector<1x128xf32>
      %35 = arith.truncf %34 : vector<1x128xf32> to vector<1x128xbf16>
      %c0_25 = arith.constant 0 : index
      %c0_26 = arith.constant 0 : index
      %c0_27 = arith.constant 0 : index
      %36 = vector.load %arg7[%c0_25, %c0_26, %c0_27] : memref<1x1x128xbf16, #tpu.memory_space<vmem>>, vector<1x1x128xbf16>
      %37 = vector.shape_cast %36 : vector<1x1x128xbf16> to vector<1x128xbf16>
      %38 = vector.shape_cast %35 : vector<1x128xbf16> to vector<1x1x128xbf16>
      tpu.vector_store %arg7[%c0_25, %c0_26, %c0_27], %38 {strides = array<i32>} : memref<1x1x128xbf16, #tpu.memory_space<vmem>>, vector<1x1x128xbf16>,
    } else {
    }
    return
  }
  func.func @transform_0(%arg0: i32, %arg1: i32) -> (i32, i32, i32, i32) {
    %c0_i32 = arith.constant 0 : i32
    %c0_i32_0 = arith.constant 0 : i32
    %c0_i32_1 = arith.constant 0 : i32
    return %arg0, %arg1, %c0_i32, %c0_i32_0 : i32, i32, i32, i32
  }
  func.func @transform_1(%arg0: i32, %arg1: i32) -> (i32, i32, i32) {
    %c0_i32 = arith.constant 0 : i32
    %c0_i32_0 = arith.constant 0 : i32
    %c0_i32_1 = arith.constant 0 : i32
    return %arg1, %c0_i32, %c0_i32_0 : i32, i32, i32
  }
  func.func @transform_2(%arg0: i32, %arg1: i32) -> (i32, i32) {
    %c0_i32 = arith.constant 0 : i32
    %c0_i32_0 = arith.constant 0 : i32
    %c0_i32_1 = arith.constant 0 : i32
    return %c0_i32, %c0_i32_0 : i32, i32
  }
  func.func @transform_3(%arg0: i32, %arg1: i32) -> (i32, i32) {
    %c0_i32 = arith.constant 0 : i32
    %c0_i32_0 = arith.constant 0 : i32
    %c0_i32_1 = arith.constant 0 : i32
    return %c0_i32, %c0_i32_0 : i32, i32
  }
  func.func @transform_4(%arg0: i32, %arg1: i32) -> (i32, i32) {
    %c0_i32 = arith.constant 0 : i32
    %c0_i32_0 = arith.constant 0 : i32
    %c0_i32_1 = arith.constant 0 : i32
    return %c0_i32, %c0_i32_0 : i32, i32
  }
  func.func @transform_5(%arg0: i32, %arg1: i32) -> (i32, i32, i32) {
    %c0_i32 = arith.constant 0 : i32
    %c0_i32_0 = arith.constant 0 : i32
    %c0_i32_1 = arith.constant 0 : i32
    return %arg0, %c0_i32, %c0_i32_0 : i32, i32, i32
  }
}

</mosaic_0001>

<llo_original>
// kernel: tpu_custom_call.1
$region0: #{tpu_custom_call.1}
  #allocation0 [shape = 'u32[]', space=smem, size = 0x4, offset = 0x4, fixed_abs, tag = 'smem constant byte address 0x4 - core index']
  #allocation1 [shape = 'u32[72,128]{1,0:T(1,128)}', space=vmem, size = 0x9000, scoped, tag = 'internal scratch']
  #allocation2 [shape = 'f32[1,256]{1,0:T(1,128)}', space=vmem, size = 0x400, scoped, tag = 'scratch operand']
  %s0 = inlined_call_operand.vmem [shape: bf16[2,2,1,48], index: 0, kind: input, shape index: {}]
  %s1 = inlined_call_operand.hbm [shape: bf16[2,48,256], index: 1, kind: input, shape index: {}]
  %s2 = inlined_call_operand.hbm [shape: bf16[256,128], index: 2, kind: input, shape index: {}]
  %s3 = inlined_call_operand.vmem [shape: f32[1,256], index: 3, kind: input, shape index: {}]
  %s4 = inlined_call_operand.vmem [shape: f32[1,128], index: 4, kind: input, shape index: {}]
  %s5 = inlined_call_operand.vmem [shape: bf16[2,1,128], index: 5, kind: output, shape index: {}]
  %s6 = sld [smem:[#allocation0]]
  $region69: #{tpu_custom_call.1} parent=0
    _
  %s8 = ssub.s32 1, %s6
  %s9 = scalar_select 0, %s8, %s6
  $region1: #{tpu_custom_call.1} parent=0
    #allocation3 [shape = 'u8[49152]{0}', space=vmem, size = 0xc000, scoped, tag = 'input window, operand 1']
    #allocation4 [shape = 's32[2]{0}', space=sflag, size = 0x8, scoped, tag = 'scoped memory for tpu_custom_call.1']
    #allocation5 [shape = 'u8[65536]{0}', space=vmem, size = 0x10000, scoped, tag = 'input window, operand 2, single buffered']
    #allocation6 [shape = 's32[1]{0}', space=sflag, size = 0x4, scoped, tag = 'scoped memory for tpu_custom_call.1']
    %10 = vsyncpa [#allocation4], 0
    %s11 = scalar_lea.sflag [#allocation4], 1
    %12 = vsyncpa %s11, 0
    %13 = vsyncpa [#allocation6], 0
    loop: start=0, step=1, limit=6
    $region2: #{tpu_custom_call.1} parent=1 // loop_pre_header
      _
    $region3: #{tpu_custom_call.1} parent=1 // loop_header
      %s15 = sphi 0, %s19
      %p16 = scmp.ge.s32.totalorder %s15, 6
      %s22 = sphi 0, %s34
      %s23 = sphi 0, %s30
      %s24 = sphi 0, %s22
      %s25 = sphi 0, %s23
      %s26 = sphi 0, %s24
      %s27 = sphi 0, %s25
      %s39 = sphi 0, %s41
      %s42 = sphi 0, %s39
      %s43 = sphi 0, %s42
      %s59 = sphi 0, %s43
      %s65 = sphi 0, %s67
      %s68 = sphi 0, %s65
      %s69 = sphi 0, %s68
      %s85 = sphi 0, %s69
      %s89 = sphi 0, %s89
      %s91 = sphi 0, %s89
      %s92 = sphi 0, %s91
      %s106 = sphi 0, %s92
      %s110 = sphi 0, %s110
      %s112 = sphi 0, %s110
      %s113 = sphi 0, %s112
      %s127 = sphi 0, %s113
      %s131 = sphi 0, %s131
      %s133 = sphi 0, %s131
      %s134 = sphi 0, %s133
      %s148 = sphi 0, %s134
      %s154 = sphi 0, %s156
      %s157 = sphi 0, %s154
      %s158 = sphi 0, %s157
      %s174 = sphi 0, %s158
    $region4: #{tpu_custom_call.1} parent=1 // loop_header_branch
      %18 = sbr.rel (%p16) target = $region8
    $region5: #{tpu_custom_call.1} parent=1 // loop_body
      %s20 = ssub.s32 %s15, 1
      %s21 = ssub.s32 %s15, 2
      %s28 = sadd.s32 1, %s23
      %p29 = scmp.ge.s32.totalorder %s28, 2
      %s30 = scalar_select %p29, 0, %s28
      %s31 = sadd.s32 1, %s22
      %s32 = scalar_select %p29, %s31, %s22
      %p33 = scmp.ge.s32.totalorder %s32, 2
      %s34 = scalar_select %p33, 0, %s32
      %s35 = ssub.s32 %s22, %s34
      %s36 = ssub.s32 %s23, %s30
      %s37 = sor.u32 %s35, %s36
      %p38 = scmp.eq.s32.totalorder %s37, 0
      %s40 = sadd.s32 %s39, 1
      %s41 = scalar_select %p38, %s39, %s40
      %p44 = pneg %p38
      %p45 = scmp.eq.s32.totalorder %s15, 3
      %p46 = por %p44, %p45
      %p47 = scmp.ne.s32.totalorder %s39, %s42
      %p48 = scmp.eq.s32.totalorder %s15, 0
      %p49 = por %p47, %p48
      %p50 = scmp.ne.s32.totalorder %s39, %s42
      %p51 = scmp.eq.s32.totalorder %s20, 3
      %p52 = por %p50, %p51
      %p53 = scmp.ne.s32.totalorder %s42, %s43
      %p54 = scmp.eq.s32.totalorder %s20, 0
      %p55 = por %p53, %p54
      %p56 = scmp.ne.s32.totalorder %s42, %s43
      %p57 = scmp.eq.s32.totalorder %s21, 3
      %p58 = por %p56, %p57
      %p60 = scmp.ne.s32.totalorder %s43, %s59
      %p61 = scmp.eq.s32.totalorder %s21, 0
      %p62 = por %p60, %p61
      %s63 = ssub.s32 %s23, %s30
      %p64 = scmp.eq.s32.totalorder %s63, 0
      %s66 = sadd.s32 %s65, 1
      %s67 = scalar_select %p64, %s65, %s66
      %p70 = pneg %p64
      %p71 = scmp.eq.s32.totalorder %s15, 3
      %p72 = por %p70, %p71
      %p73 = scmp.ne.s32.totalorder %s65, %s68
      %p74 = scmp.eq.s32.totalorder %s15, 0
      %p75 = por %p73, %p74
      %p76 = scmp.ne.s32.totalorder %s65, %s68
      %p77 = scmp.eq.s32.totalorder %s20, 3
      %p78 = por %p76, %p77
      %p79 = scmp.ne.s32.totalorder %s68, %s69
      %p80 = scmp.eq.s32.totalorder %s20, 0
      %p81 = por %p79, %p80
      %p82 = scmp.ne.s32.totalorder %s68, %s69
      %p83 = scmp.eq.s32.totalorder %s21, 3
      %p84 = por %p82, %p83
      %p86 = scmp.ne.s32.totalorder %s69, %s85
      %p87 = scmp.eq.s32.totalorder %s21, 0
      %p88 = por %p86, %p87
      %s90 = sadd.s32 %s89, 1
      %p93 = scmp.eq.s32.totalorder %s15, 3
      %p94 = scmp.ne.s32.totalorder %s89, %s91
      %p95 = scmp.eq.s32.totalorder %s15, 0
      %p96 = por %p94, %p95
      %p97 = scmp.ne.s32.totalorder %s89, %s91
      %p98 = scmp.eq.s32.totalorder %s20, 3
      %p99 = por %p97, %p98
      %p100 = scmp.ne.s32.totalorder %s91, %s92
      %p101 = scmp.eq.s32.totalorder %s20, 0
      %p102 = por %p100, %p101
      %p103 = scmp.ne.s32.totalorder %s91, %s92
      %p104 = scmp.eq.s32.totalorder %s21, 3
      %p105 = por %p103, %p104
      %p107 = scmp.ne.s32.totalorder %s92, %s106
      %p108 = scmp.eq.s32.totalorder %s21, 0
      %p109 = por %p107, %p108
      %s111 = sadd.s32 %s110, 1
      %p114 = scmp.eq.s32.totalorder %s15, 3
      %p115 = scmp.ne.s32.totalorder %s110, %s112
      %p116 = scmp.eq.s32.totalorder %s15, 0
      %p117 = por %p115, %p116
      %p118 = scmp.ne.s32.totalorder %s110, %s112
      %p119 = scmp.eq.s32.totalorder %s20, 3
      %p120 = por %p118, %p119
      %p121 = scmp.ne.s32.totalorder %s112, %s113
      %p122 = scmp.eq.s32.totalorder %s20, 0
      %p123 = por %p121, %p122
      %p124 = scmp.ne.s32.totalorder %s112, %s113
      %p125 = scmp.eq.s32.totalorder %s21, 3
      %p126 = por %p124, %p125
      %p128 = scmp.ne.s32.totalorder %s113, %s127
      %p129 = scmp.eq.s32.totalorder %s21, 0
      %p130 = por %p128, %p129
      %s132 = sadd.s32 %s131, 1
      %p135 = scmp.eq.s32.totalorder %s15, 3
      %p136 = scmp.ne.s32.totalorder %s131, %s133
      %p137 = scmp.eq.s32.totalorder %s15, 0
      %p138 = por %p136, %p137
      %p139 = scmp.ne.s32.totalorder %s131, %s133
      %p140 = scmp.eq.s32.totalorder %s20, 3
      %p141 = por %p139, %p140
      %p142 = scmp.ne.s32.totalorder %s133, %s134
      %p143 = scmp.eq.s32.totalorder %s20, 0
      %p144 = por %p142, %p143
      %p145 = scmp.ne.s32.totalorder %s133, %s134
      %p146 = scmp.eq.s32.totalorder %s21, 3
      %p147 = por %p145, %p146
      %p149 = scmp.ne.s32.totalorder %s134, %s148
      %p150 = scmp.eq.s32.totalorder %s21, 0
      %p151 = por %p149, %p150
      %s152 = ssub.s32 %s22, %s34
      %p153 = scmp.eq.s32.totalorder %s152, 0
      %s155 = sadd.s32 %s154, 1
      %s156 = scalar_select %p153, %s154, %s155
      %p159 = pneg %p153
      %p160 = scmp.eq.s32.totalorder %s15, 3
      %p161 = por %p159, %p160
      %p162 = scmp.ne.s32.totalorder %s154, %s157
      %p163 = scmp.eq.s32.totalorder %s15, 0
      %p164 = por %p162, %p163
      %p165 = scmp.ne.s32.totalorder %s154, %s157
      %p166 = scmp.eq.s32.totalorder %s20, 3
      %p167 = por %p165, %p166
      %p168 = scmp.ne.s32.totalorder %s157, %s158
      %p169 = scmp.eq.s32.totalorder %s20, 0
      %p170 = por %p168, %p169
      %p171 = scmp.ne.s32.totalorder %s157, %s158
      %p172 = scmp.eq.s32.totalorder %s21, 3
      %p173 = por %p171, %p172
      %p175 = scmp.ne.s32.totalorder %s158, %s174
      %p176 = scmp.eq.s32.totalorder %s21, 0
      %p177 = por %p175, %p176
      %p178 = scmp.le.s32.totalorder 1, %s15
      %p179 = scmp.lt.s32.totalorder %s15, 5
      %p180 = pnand %p178, %p179
      %p181 = pneg %p180
      // Predicated region
      $region9: #{tpu_custom_call.1} parent=5 // pred_check
        _
      $region10: #{tpu_custom_call.1} parent=5 // pred_check_branch
        %183 = sbr.rel (%p180) target = $region12
      $region11: #{tpu_custom_call.1} parent=5 // pred_region
        %s184 = ssub.s32 %s15, 1
        // Predicated region
        $region13: #{tpu_custom_call.1} parent=11 // pred_check
          %p185 = pneg %p102
        $region14: #{tpu_custom_call.1} parent=11 // pred_check_branch
          %187 = sbr.rel (%p185) target = $region16
        $region15: #{tpu_custom_call.1} parent=11 // pred_region
          %189 = vsyncadd [#allocation6], 0
          %s190 = sshll.u32 %s2, 4
          %s191 = int_to_ptr.hbm [resolvable:$true] %s190
          %s192 = sshll.u32 [#allocation5], 4
          %s193 = int_to_ptr.vmem [resolvable:$true] %s192
          %198 = dma.hbm_to_vmem [thread:$0]  %s191, 2048, %s193, [#allocation6], 64, 64, 4
        $region16: #{tpu_custom_call.1} parent=11 // pred_fallthru
          _
        // Predicated region
        $region17: #{tpu_custom_call.1} parent=11 // pred_check
          %p199 = pneg %p123
        $region18: #{tpu_custom_call.1} parent=11 // pred_check_branch
          %201 = sbr.rel (%p199) target = $region20
        $region19: #{tpu_custom_call.1} parent=11 // pred_region
          _
        $region20: #{tpu_custom_call.1} parent=11 // pred_fallthru
          _
        // Predicated region
        $region21: #{tpu_custom_call.1} parent=11 // pred_check
          %p202 = pneg %p144
        $region22: #{tpu_custom_call.1} parent=11 // pred_check_branch
          %204 = sbr.rel (%p202) target = $region24
        $region23: #{tpu_custom_call.1} parent=11 // pred_region
          _
        $region24: #{tpu_custom_call.1} parent=11 // pred_fallthru
          _
      $region12: #{tpu_custom_call.1} parent=5 // pred_fallthru
        _
      %p205 = scmp.lt.s32.totalorder %s15, 4
      // Predicated region
      $region25: #{tpu_custom_call.1} parent=5 // pred_check
        %p206 = pneg %p205
      $region26: #{tpu_custom_call.1} parent=5 // pred_check_branch
        %208 = sbr.rel (%p206) target = $region28
      $region27: #{tpu_custom_call.1} parent=5 // pred_region
        // Predicated region
        $region29: #{tpu_custom_call.1} parent=27 // pred_check
          %p209 = pneg %p49
        $region30: #{tpu_custom_call.1} parent=27 // pred_check_branch
          %211 = sbr.rel (%p209) target = $region32
        $region31: #{tpu_custom_call.1} parent=27 // pred_region
          %p212 = scmp.lt.s32.totalorder %s22, 1
          %s213 = scalar_select %p212, %s22, 1
          %p214 = scmp.lt.s32.totalorder %s23, 1
          %s215 = scalar_select %p214, %s23, 1
          %s216 = smul.addr %s213, 2
          %s217 = sadd.s32 %s215, %s216
          %s218 = scalar_lea.vmem %s0, %s217
        $region32: #{tpu_custom_call.1} parent=27 // pred_fallthru
          _
        // Predicated region
        $region33: #{tpu_custom_call.1} parent=27 // pred_check
          %p219 = pneg %p75
        $region34: #{tpu_custom_call.1} parent=27 // pred_check_branch
          %221 = sbr.rel (%p219) target = $region36
        $region35: #{tpu_custom_call.1} parent=27 // pred_region
          %s222 = sand.u32 %s65, 1
          %s223 = scalar_lea.sflag [#allocation4], %s222
          %s224 = sand.u32 %s65, 1
          %s225 = smul.addr %s224, 48
          %s226 = scalar_lea.vmem [#allocation3], %s225
          %228 = vsyncadd %s223, 0
          %s229 = smul.addr %s23, 12
          %s230 = smul.addr %s229, 4
          %s231 = scalar_lea.hbm %s1, %s230
          %s232 = sshll.u32 %s231, 4
          %s233 = int_to_ptr.hbm [resolvable:$true] %s232
          %s234 = sshll.u32 %s226, 4
          %s235 = int_to_ptr.vmem [resolvable:$true] %s234
          %240 = dma.hbm_to_vmem [thread:$0]  %s233, 768, %s235, %s223, 128, 128, 8
        $region36: #{tpu_custom_call.1} parent=27 // pred_fallthru
          _
      $region28: #{tpu_custom_call.1} parent=5 // pred_fallthru
        _
      %p241 = scmp.le.s32.totalorder 1, %s15
      %p242 = scmp.lt.s32.totalorder %s15, 5
      %p243 = pnand %p241, %p242
      %p244 = pneg %p243
      // Predicated region
      $region37: #{tpu_custom_call.1} parent=5 // pred_check
        _
      $region38: #{tpu_custom_call.1} parent=5 // pred_check_branch
        %246 = sbr.rel (%p243) target = $region40
      $region39: #{tpu_custom_call.1} parent=5 // pred_region
        %s247 = ssub.s32 %s15, 1
        %s248 = sand.u32 %s68, 1
        %s249 = scalar_lea.sflag [#allocation4], %s248
        %s250 = sand.u32 %s68, 1
        %s251 = smul.addr %s250, 48
        %s252 = scalar_lea.vmem [#allocation3], %s251
        // Predicated region
        $region41: #{tpu_custom_call.1} parent=39 // pred_check
          %p253 = pneg %p81
        $region42: #{tpu_custom_call.1} parent=39 // pred_check_branch
          %255 = sbr.rel (%p253) target = $region44
        $region43: #{tpu_custom_call.1} parent=39 // pred_region
          %257 = dma.done %s249, 768
        $region44: #{tpu_custom_call.1} parent=39 // pred_fallthru
          _
        // Predicated region
        $region45: #{tpu_custom_call.1} parent=39 // pred_check
          %p258 = pneg %p102
        $region46: #{tpu_custom_call.1} parent=39 // pred_check_branch
          %260 = sbr.rel (%p258) target = $region48
        $region47: #{tpu_custom_call.1} parent=39 // pred_region
          %262 = dma.done [#allocation6], 2048
        $region48: #{tpu_custom_call.1} parent=39 // pred_fallthru
          _
        %p263 = scmp.lt.s32.totalorder %s24, 1
        %s264 = scalar_select %p263, %s24, 1
        %p265 = scmp.lt.s32.totalorder %s25, 1
        %s266 = scalar_select %p265, %s25, 1
        %s267 = smul.addr %s264, 2
        %s268 = sadd.s32 %s266, %s267
        %s269 = scalar_lea.vmem %s0, %s268
        %p270 = pneg %p55
        %p271 = pneg %p52
        %s272 = sand.u32 %s68, 1
        %s273 = scalar_lea.sflag [#allocation4], %s272
        %s274 = sand.u32 %s68, 1
        %s275 = smul.addr %s274, 48
        %s276 = scalar_lea.vmem [#allocation3], %s275
        %p277 = pneg %p81
        %p278 = pneg %p78
        %p279 = pneg %p102
        %p280 = pneg %p99
        %p281 = pneg %p123
        %p282 = pneg %p120
        %p283 = pneg %p144
        %p284 = pneg %p141
        %p285 = pneg %p170
        %p286 = pneg %p167
        %p287 = scmp.lt.s32.totalorder %s24, 1
        %s288 = scalar_select %p287, %s24, 1
        %s289 = scalar_lea.vmem %s5, %s288
        %p290 = scmp.lt.s32.totalorder %s24, 1
        %s291 = scalar_select %p290, %s24, 1
        %p292 = scmp.lt.s32.totalorder %s25, 1
        %s293 = scalar_select %p292, %s25, 1
        %s294 = smul.addr %s291, 2
        %s295 = sadd.s32 %s293, %s294
        %s296 = scalar_lea.vmem %s0, %s295
        %p297 = scmp.lt.s32.totalorder %s24, 1
        %s298 = scalar_select %p297, %s24, 1
        %s299 = scalar_lea.vmem %s5, %s298
        %p301 = scmp.eq.s32.totalorder %s25, 0
        // Predicated region
        $region49: #{tpu_custom_call.1} parent=39 // pred_check
          %p302 = pneg %p301
        $region50: #{tpu_custom_call.1} parent=39 // pred_check_branch
          %304 = sbr.rel (%p302) target = $region52
        $region51: #{tpu_custom_call.1} parent=39 // pred_region
          %v305 = vlaneseq
          %vm306 = vcmp.ge.s32.totalorder %v305, 0
          %vm307 = vcmp.lt.s32.totalorder %v305, 256
          %vm308 = vmand %vm306, %vm307
          %309 = vst.msk [vmem:[#allocation2] sm:$0x3] %vm308, 0.0
        $region52: #{tpu_custom_call.1} parent=39 // pred_fallthru
          _
        %v310 = vld [vmem:[#allocation2] sm:$0x3]
        %v311 = vld [vmem:[%s296] sm:$0x1]
        %v312 = vld [vmem:[%s252] sm:$0xff]
        %v313 = vld [vmem:[%s252 + $0x8] sm:$0xff]
        %v314 = vld [vmem:[%s252 + $0x10] sm:$0xff]
        %v315 = vld [vmem:[%s252 + $0x18] sm:$0xff]
        %v316 = vld [vmem:[%s252 + $0x20] sm:$0xff]
        %v317 = vld [vmem:[%s252 + $0x28] sm:$0xff]
        %v324 = vunpack.c.l.b16 %v312
        %v325 = vunpack.c.h.b16 %v312
        %v326 = vunpack.c.l.b16 %v313
        %v327 = vunpack.c.h.b16 %v313
        %v328 = vunpack.c.l.b16 %v314
        %v329 = vunpack.c.h.b16 %v314
        %v330 = vunpack.c.l.b16 %v315
        %v331 = vunpack.c.h.b16 %v315
        %v332 = vunpack.c.l.b16 %v316
        %v333 = vunpack.c.h.b16 %v316
        %v334 = vunpack.c.l.b16 %v317
        %v335 = vunpack.c.h.b16 %v317
        %v336 = vpack.c.b16 %v326, %v324
        %v337 = vpack.c.b16 %v327, %v325
        %v338 = vpack.c.b16 %v330, %v328
        %v339 = vpack.c.b16 %v331, %v329
        %v340 = vpack.c.b16 %v334, %v332
        %v341 = vpack.c.b16 %v335, %v333
        %vm348 = vcmask 392192
        %v350 = vsel %vm348, %v311, 0
        %352 = vmatpush.bf16.msra.mxu0 0
        %353 = vmatpush.bf16.msra.mxu0 0
        %354 = vmatpush.bf16.msra.mxu0 0
        %355 = vmatpush.bf16.msra.mxu0 0
        %356 = vmatpush.bf16.msra.mxu0 0
        %357 = vmatpush.bf16.msra.mxu0 %v340
        %358 = vmatpush.bf16.msra.mxu0 %v338
        %359 = vmatpush.bf16.msra.mxu0 %v336
        %360 = vmatmul.bf16.gmra.mxu0 %v350
        %v361 = vpop.f32.mrf.mxu0
        %v362 = vadd.f32 0.0, %v361
        %v363 = vpop.f32.mrf.mxu0
        %364 = vdwg.mxu0
        %365 = vmatpush.bf16.msra.mxu0 0
        %366 = vmatpush.bf16.msra.mxu0 0
        %367 = vmatpush.bf16.msra.mxu0 0
        %368 = vmatpush.bf16.msra.mxu0 0
        %369 = vmatpush.bf16.msra.mxu0 0
        %370 = vmatpush.bf16.msra.mxu0 %v341
        %371 = vmatpush.bf16.msra.mxu0 %v339
        %372 = vmatpush.bf16.msra.mxu0 %v337
        %373 = vmatmul.bf16.gmra.mxu0 %v350
        %v374 = vpop.f32.mrf.mxu0
        %v375 = vadd.f32 0.0, %v374
        %v376 = vpop.f32.mrf.mxu0
        %377 = vdwg.mxu0
        %v380 = vrot.slane %v375, 7
        %vm381 = vcmask 1040384
        %v382 = vsel %vm381, %v362, %v380
        %v384 = vadd.f32 %v310, %v382
        %v385 = vlaneseq
        %vm386 = vcmp.ge.s32.totalorder %v385, 0
        %vm387 = vcmp.lt.s32.totalorder %v385, 256
        %vm388 = vmand %vm386, %vm387
        %389 = vst.msk [vmem:[#allocation2] sm:$0x3] %vm388, %v384
        %p390 = scmp.eq.s32.totalorder %s25, 1
        // Predicated region
        $region53: #{tpu_custom_call.1} parent=39 // pred_check
          %p391 = pneg %p390
        $region54: #{tpu_custom_call.1} parent=39 // pred_check_branch
          %393 = sbr.rel (%p391) target = $region56
        $region55: #{tpu_custom_call.1} parent=39 // pred_region
          %v394 = vld [vmem:[#allocation2] sm:$0x3]
          %v395 = vld [vmem:[%s3] sm:$0x3]
          %v396 = vadd.f32 %v394, %v395
          %v397 = vmul.f32 %v396, %v396
          %v398 = vmul.f32 %v396, %v397
          %v399 = vmul.f32 %v398, 0.044715
          %v400 = vadd.f32 %v396, %v399
          %v401 = vmul.f32 %v400, 0.7978846
          %v402 = vtanh.pop %v401
          %v403 = vadd.f32 %v402, 1.0
          %v404 = vmul.f32 %v403, 0.5
          %v405 = vmul.f32 %v396, %v404
          %v407 = vperm.slane %v405, 0
          %v408 = vperm.slane %v405, 1
          %v411 = vpack.c.bf16 %v407, %v407
          %v412 = vpack.c.bf16 %v408, %v408
          %v413 = vld [vmem:[#allocation5] sm:$0xf]
          %v414 = vld [vmem:[#allocation5 + $0x4] sm:$0xf]
          %v415 = vld [vmem:[#allocation5 + $0x8] sm:$0xf]
          %v416 = vld [vmem:[#allocation5 + $0xc] sm:$0xf]
          %v417 = vld [vmem:[#allocation5 + $0x10] sm:$0xf]
          %v418 = vld [vmem:[#allocation5 + $0x14] sm:$0xf]
          %v419 = vld [vmem:[#allocation5 + $0x18] sm:$0xf]
          %v420 = vld [vmem:[#allocation5 + $0x1c] sm:$0xf]
          %v421 = vld [vmem:[#allocation5 + $0x20] sm:$0xf]
          %v422 = vld [vmem:[#allocation5 + $0x24] sm:$0xf]
          %v423 = vld [vmem:[#allocation5 + $0x28] sm:$0xf]
          %v424 = vld [vmem:[#allocation5 + $0x2c] sm:$0xf]
          %v425 = vld [vmem:[#allocation5 + $0x30] sm:$0xf]
          %v426 = vld [vmem:[#allocation5 + $0x34] sm:$0xf]
          %v427 = vld [vmem:[#allocation5 + $0x38] sm:$0xf]
          %v428 = vld [vmem:[#allocation5 + $0x3c] sm:$0xf]
          %v429 = vld [vmem:[#allocation5 + $0x40] sm:$0xf]
          %v430 = vld [vmem:[#allocation5 + $0x44] sm:$0xf]
          %v431 = vld [vmem:[#allocation5 + $0x48] sm:$0xf]
          %v432 = vld [vmem:[#allocation5 + $0x4c] sm:$0xf]
          %v433 = vld [vmem:[#allocation5 + $0x50] sm:$0xf]
          %v434 = vld [vmem:[#allocation5 + $0x54] sm:$0xf]
          %v435 = vld [vmem:[#allocation5 + $0x58] sm:$0xf]
          %v436 = vld [vmem:[#allocation5 + $0x5c] sm:$0xf]
          %v437 = vld [vmem:[#allocation5 + $0x60] sm:$0xf]
          %v438 = vld [vmem:[#allocation5 + $0x64] sm:$0xf]
          %v439 = vld [vmem:[#allocation5 + $0x68] sm:$0xf]
          %v440 = vld [vmem:[#allocation5 + $0x6c] sm:$0xf]
          %v441 = vld [vmem:[#allocation5 + $0x70] sm:$0xf]
          %v442 = vld [vmem:[#allocation5 + $0x74] sm:$0xf]
          %v443 = vld [vmem:[#allocation5 + $0x78] sm:$0xf]
          %v444 = vld [vmem:[#allocation5 + $0x7c] sm:$0xf]
          %v445 = vld [vmem:[%s4] sm:$0x1]
          %v478 = vunpack.c.l.b16 %v413
          %v479 = vunpack.c.l.b16 %v414
          %v480 = vunpack.c.l.b16 %v415
          %v481 = vunpack.c.l.b16 %v416
          %v482 = vunpack.c.l.b16 %v417
          %v483 = vunpack.c.l.b16 %v418
          %v484 = vunpack.c.l.b16 %v419
          %v485 = vunpack.c.l.b16 %v420
          %v486 = vunpack.c.l.b16 %v421
          %v487 = vunpack.c.l.b16 %v422
          %v488 = vunpack.c.l.b16 %v423
          %v489 = vunpack.c.l.b16 %v424
          %v490 = vunpack.c.l.b16 %v425
          %v491 = vunpack.c.l.b16 %v426
          %v492 = vunpack.c.l.b16 %v427
          %v493 = vunpack.c.l.b16 %v428
          %v494 = vunpack.c.l.b16 %v429
          %v495 = vunpack.c.l.b16 %v430
          %v496 = vunpack.c.l.b16 %v431
          %v497 = vunpack.c.l.b16 %v432
          %v498 = vunpack.c.l.b16 %v433
          %v499 = vunpack.c.l.b16 %v434
          %v500 = vunpack.c.l.b16 %v435
          %v501 = vunpack.c.l.b16 %v436
          %v502 = vunpack.c.l.b16 %v437
          %v503 = vunpack.c.l.b16 %v438
          %v504 = vunpack.c.l.b16 %v439
          %v505 = vunpack.c.l.b16 %v440
          %v506 = vunpack.c.l.b16 %v441
          %v507 = vunpack.c.l.b16 %v442
          %v508 = vunpack.c.l.b16 %v443
          %v509 = vunpack.c.l.b16 %v444
          %v510 = vpack.c.b16 %v479, %v478
          %v511 = vpack.c.b16 %v481, %v480
          %v512 = vpack.c.b16 %v483, %v482
          %v513 = vpack.c.b16 %v485, %v484
          %v514 = vpack.c.b16 %v487, %v486
          %v515 = vpack.c.b16 %v489, %v488
          %v516 = vpack.c.b16 %v491, %v490
          %v517 = vpack.c.b16 %v493, %v492
          %v518 = vpack.c.b16 %v495, %v494
          %v519 = vpack.c.b16 %v497, %v496
          %v520 = vpack.c.b16 %v499, %v498
          %v521 = vpack.c.b16 %v501, %v500
          %v522 = vpack.c.b16 %v503, %v502
          %v523 = vpack.c.b16 %v505, %v504
          %v524 = vpack.c.b16 %v507, %v506
          %v525 = vpack.c.b16 %v509, %v508
          %542 = vmatpush.bf16.msra.mxu0 %v517
          %543 = vmatpush.bf16.msra.mxu0 %v516
          %544 = vmatpush.bf16.msra.mxu0 %v515
          %545 = vmatpush.bf16.msra.mxu0 %v514
          %546 = vmatpush.bf16.msra.mxu0 %v513
          %547 = vmatpush.bf16.msra.mxu0 %v512
          %548 = vmatpush.bf16.msra.mxu0 %v511
          %549 = vmatpush.bf16.msra.mxu0 %v510
          %550 = vmatmul.bf16.gmra.mxu0 %v411
          %v551 = vpop.f32.mrf.mxu0
          %v552 = vadd.f32 %v445, %v551
          %v553 = vpop.f32.mrf.mxu0
          %554 = vdwg.mxu0
          %555 = vmatpush.bf16.msra.mxu0 %v525
          %556 = vmatpush.bf16.msra.mxu0 %v524
          %557 = vmatpush.bf16.msra.mxu0 %v523
          %558 = vmatpush.bf16.msra.mxu0 %v522
          %559 = vmatpush.bf16.msra.mxu0 %v521
          %560 = vmatpush.bf16.msra.mxu0 %v520
          %561 = vmatpush.bf16.msra.mxu0 %v519
          %562 = vmatpush.bf16.msra.mxu0 %v518
          %563 = vmatmul.bf16.gmra.mxu0 %v412
          %v564 = vpop.f32.mrf.mxu0
          %v565 = vadd.f32 %v552, %v564
          %v566 = vpop.f32.mrf.mxu0
          %567 = vdwg.mxu0
          %v568 = vpack.c.bf16 %v565, %v565
          %vm569 = vcmask 1040384
          %vm570 = vsmask.f32 256
          %vm571 = vmand %vm569, %vm570
          %v572 = vld [vmem:[%s299] sm:$0x1]
          %v573 = vsel %vm571, %v568, %v572
          %574 = vst [vmem:[%s299] sm:$0x1] %v573
        $region56: #{tpu_custom_call.1} parent=39 // pred_fallthru
          _
        %p575 = scmp.lt.s32.totalorder %s24, 1
        %s576 = scalar_select %p575, %s24, 1
        %s577 = scalar_lea.vmem %s5, %s576
        // Predicated region
        $region57: #{tpu_custom_call.1} parent=39 // pred_check
          %p578 = pneg %p167
        $region58: #{tpu_custom_call.1} parent=39 // pred_check_branch
          %580 = sbr.rel (%p578) target = $region60
        $region59: #{tpu_custom_call.1} parent=39 // pred_region
          _
        $region60: #{tpu_custom_call.1} parent=39 // pred_fallthru
          _
      $region40: #{tpu_custom_call.1} parent=5 // pred_fallthru
        _
      %p581 = scmp.le.s32.totalorder 2, %s15
      // Predicated region
      $region61: #{tpu_custom_call.1} parent=5 // pred_check
        %p582 = pneg %p581
      $region62: #{tpu_custom_call.1} parent=5 // pred_check_branch
        %584 = sbr.rel (%p582) target = $region64
      $region63: #{tpu_custom_call.1} parent=5 // pred_region
        %s585 = ssub.s32 %s15, 2
        // Predicated region
        $region65: #{tpu_custom_call.1} parent=63 // pred_check
          %p586 = pneg %p173
        $region66: #{tpu_custom_call.1} parent=63 // pred_check_branch
          %588 = sbr.rel (%p586) target = $region68
        $region67: #{tpu_custom_call.1} parent=63 // pred_region
          %p589 = scmp.lt.s32.totalorder %s26, 1
          %s590 = scalar_select %p589, %s26, 1
          %s591 = scalar_lea.vmem %s5, %s590
        $region68: #{tpu_custom_call.1} parent=63 // pred_fallthru
          _
      $region64: #{tpu_custom_call.1} parent=5 // pred_fallthru
        _
    $region6: #{tpu_custom_call.1} parent=1 // loop_footer
      %s19 = sadd.s32 1, %s15
    $region7: #{tpu_custom_call.1} parent=1 // loop_footer_branch
      %14 = sbr.rel target = $region3
    $region8: #{tpu_custom_call.1} parent=1 // loop_exit
      _
    %592 = vsyncpa [#allocation4], 1
    %s593 = scalar_lea.sflag [#allocation4], 1
    %594 = vsyncpa %s593, 1
    %595 = vsyncpa [#allocation6], 1

</llo_original>
